<compile_context>
chip_gen: v7x
topology: tpu7x:2x2x1
jax: 0.10.0
libtpu: 0.0.40
codegen_flags: <defaults>
</compile_context>

<pallas_src>
import functools
import math

import jax
import jax.numpy as jnp
from jax.experimental import pallas as pl
from jax.experimental.pallas import tpu as pltpu

LANE = 128     # vreg lane width; hidden (32) and output (8) dims padded to this
SUBLANE = 8


def _round_up(n, m):
    return ((n + m - 1) // m) * m


def rnn_fc_kernel(x_ref, params_ref, out_ref, *, d_in, hp, block_b):
    """Fused RNN step (h0 == 0) + Linear head for one block of `block_b` rows.

    params_ref layout (single packed slab, all boundaries multiples of 8 rows):
        rows [0, d_in)                  w_ih^T   (d_in, hp)      zero-padded
        rows [d_in, d_in+block_b)       b_ih+b_hh broadcast to (block_b, hp)
        rows [.., .. + hp)              w_fc^T   (hp, LANE)      zero-padded
        rows [.., .. + block_b)         b_fc broadcast to (block_b, LANE)
    """
    r0 = d_in
    r1 = r0 + block_b
    r2 = r1 + hp
    r3 = r2 + block_b

    w_ih = params_ref[0:r0, :]       # (d_in, hp)
    b1 = params_ref[r0:r1, :]        # (block_b, hp)
    w_fc = params_ref[r1:r2, :]      # (hp, LANE)
    b_fc = params_ref[r2:r3, :]      # (block_b, LANE)

    x = x_ref[...]                   # (block_b, d_in)

    # h0 == 0 in the PyTorch forward -> the W_hh term contributes exactly zero
    # and is omitted entirely.
    h1 = jnp.tanh(
        jnp.dot(x, w_ih,
                preferred_element_type=jnp.float32,
                precision=jax.lax.Precision.HIGHEST)
        + b1)                        # (block_b, hp)
    out = (jnp.dot(h1, w_fc,
                   preferred_element_type=jnp.float32,
                   precision=jax.lax.Precision.HIGHEST)
           + b_fc)                   # (block_b, LANE), lane-dense unmasked store
    out_ref[...] = out.astype(out_ref.dtype)


@functools.partial(jax.jit, static_argnames=("d_out",))
def rnn_forward(x, params_slab, *, d_out):
    """x: (B, d_in) float32.  params_slab: packed/padded parameter slab from
    prepare_params().  Returns (B, d_out) float32."""
    B, d_in = x.shape
    slab_rows, hp = params_slab.shape
    block_b = (slab_rows - d_in - hp) // 2      # bias row count == row tile

    b_padded = _round_up(B, block_b)
    if b_padded != B:
        x = jnp.pad(x, ((0, b_padded - B), (0, 0)))
    num_blocks = b_padded // block_b

    fsz = jnp.dtype(jnp.float32).itemsize
    cost = pl.CostEstimate(
        flops=2 * b_padded * d_in * hp + 2 * b_padded * hp * LANE,
        transcendentals=b_padded * hp,          # tanh
        bytes_accessed=fsz * (b_padded * d_in + slab_rows * hp + b_padded * LANE),
    )

    kernel = functools.partial(rnn_fc_kernel, d_in=d_in, hp=hp, block_b=block_b)

    out_padded = pl.pallas_call(
        kernel,
        out_shape=jax.ShapeDtypeStruct((b_padded, LANE), jnp.float32),
        grid_spec=pltpu.PrefetchScalarGridSpec(
            num_scalar_prefetch=0,
            grid=(num_blocks,),
            in_specs=[
                # row blocks of x march down the batch/token axis
                pl.BlockSpec((block_b, d_in), lambda i: (i, 0)),
                # one packed parameter slab, constant index_map ->
                # DMA'd once, VMEM-resident across all grid steps
                pl.BlockSpec((slab_rows, hp), lambda i: (0, 0)),
            ],
            out_specs=pl.BlockSpec((block_b, LANE), lambda i: (i, 0)),
        ),
        compiler_params=pltpu.CompilerParams(
            dimension_semantics=("parallel",)),
        cost_estimate=cost,
    )(x, params_slab)

    # Padded hidden columns are tanh(0)=0 and hit zero rows of w_fc; padded
    # output columns have zero weight/bias -> slicing recovers the exact result.
    return out_padded[:B, :d_out]


def init_params(key, input_size, hidden_dim, output_size):
    """Deterministic init mirroring PyTorch's U(-1/sqrt(H), 1/sqrt(H)) scheme.
    Stored pre-transposed relative to PyTorch's (out, in) layout."""
    ks = jax.random.split(key, 6)
    bound = 1.0 / math.sqrt(hidden_dim)
    u = lambda k, shape, b: jax.random.uniform(k, shape, jnp.float32, -b, b)
    return {
        "w_ih": u(ks[0], (input_size, hidden_dim), bound),
        "w_hh": u(ks[1], (hidden_dim, hidden_dim), bound),   # unused (h0 == 0)
        "b_ih": u(ks[2], (1, hidden_dim), bound),
        "b_hh": u(ks[3], (1, hidden_dim), bound),
        "w_fc": u(ks[4], (hidden_dim, output_size), bound),
        "b_fc": u(ks[5], (1, output_size), bound),
    }


def prepare_params(p, block_b):
    """One-time parameter prep (NOT in the per-call path):
      - fold b_ih + b_hh into a single bias and pre-broadcast biases to
        block_b rows (full vregs, no in-kernel broadcast)
      - zero-pad hidden/output dims to the 128-lane width
      - pack everything into one contiguous (d_in + 2*block_b + 128, 128)
        slab so the kernel takes a single parameter DMA."""
    assert block_b % SUBLANE == 0, "row tile must be a multiple of 8 sublanes"
    d_in, h = p["w_ih"].shape
    _, d_out = p["w_fc"].shape
    assert h <= LANE and d_out <= LANE, "slab packing assumes H, D_out <= 128"

    w_ih = jnp.zeros((d_in, LANE), jnp.float32).at[:, :h].set(p["w_ih"])
    b1 = jnp.zeros((block_b, LANE), jnp.float32).at[:, :h].set(
        jnp.broadcast_to(p["b_ih"] + p["b_hh"], (block_b, h)))
    w_fc = jnp.zeros((LANE, LANE), jnp.float32).at[:h, :d_out].set(p["w_fc"])
    b_fc = jnp.zeros((block_b, LANE), jnp.float32).at[:, :d_out].set(
        jnp.broadcast_to(p["b_fc"], (block_b, d_out)))

    slab = jnp.concatenate([w_ih, b1, w_fc, b_fc], axis=0)
    return slab, d_out


def rnn_reference(x, p):
    """Pure-JAX reference of the PyTorch forward (h0 = 0, single step)."""
    h1 = jnp.tanh(x @ p["w_ih"] + p["b_ih"] + p["b_hh"])
    return h1 @ p["w_fc"] + p["b_fc"]


if __name__ == "__main__":
    # Shapes consistent with the module's usage (x = torch.randn(16, 64)).
    B, INPUT_SIZE, HIDDEN, OUTPUT = 16, 64, 32, 8

    key = jax.random.PRNGKey(0)
    kx, kp = jax.random.split(key)
    x = jax.random.normal(kx, (B, INPUT_SIZE), dtype=jnp.float32)
    params = init_params(kp, INPUT_SIZE, HIDDEN, OUTPUT)

    # Row tile = batch size here; grow B toward 128 (v5e) / 256 (v6e/v7x) to
    # fill the MXU's M dimension at essentially zero marginal latency.
    block_b = _round_up(min(B, 256), SUBLANE)
    slab, d_out = prepare_params(params, block_b)

    out = jax.block_until_ready(rnn_forward(x, slab, d_out=d_out))

    ref = rnn_reference(x, params)
    assert out.shape == (B, OUTPUT), out.shape
    assert jnp.allclose(out, ref, atol=1e-5, rtol=1e-5), "mismatch vs reference"

    print("KERNEL_OK")
</pallas_src>

<mosaic_0001>
module attributes {stable_mosaic.version = 11 : i64} {
  func.func @rnn_fc_kernel(%arg0: i32, %arg1: memref<16x64xf32, #tpu.memory_space<vmem>>, %arg2: memref<224x128xf32, #tpu.memory_space<vmem>>, %arg3: memref<16x128xf32, #tpu.memory_space<vmem>>) attributes {dimension_semantics = [#tpu.dimension_semantics<parallel>], iteration_bounds = array<i64: 1>, scalar_prefetch = 0 : i64, scratch_operands = 0 : i64, tpu.core_type = #tpu.core_type<tc>, window_params = [{transform_indices = @transform_0, window_bounds = array<i64: 16, 64>}, {pipeline_mode = #tpu.pipeline_mode<synchronous>, transform_indices = @transform_1, window_bounds = array<i64: 224, 128>}, {transform_indices = @transform_2, window_bounds = array<i64: 16, 128>}]} {
    %c0 = arith.constant 0 : index
    %c0_0 = arith.constant 0 : index
    %0 = vector.load %arg2[%c0, %c0_0] : memref<224x128xf32, #tpu.memory_space<vmem>>, vector<64x128xf32>
    %c64 = arith.constant 64 : index
    %c0_1 = arith.constant 0 : index
    %1 = vector.load %arg2[%c64, %c0_1] : memref<224x128xf32, #tpu.memory_space<vmem>>, vector<16x128xf32>
    %c80 = arith.constant 80 : index
    %c0_2 = arith.constant 0 : index
    %2 = vector.load %arg2[%c80, %c0_2] : memref<224x128xf32, #tpu.memory_space<vmem>>, vector<128x128xf32>
    %c208 = arith.constant 208 : index
    %c0_3 = arith.constant 0 : index
    %3 = vector.load %arg2[%c208, %c0_3] : memref<224x128xf32, #tpu.memory_space<vmem>>, vector<16x128xf32>
    %c0_4 = arith.constant 0 : index
    %c0_5 = arith.constant 0 : index
    %4 = vector.load %arg1[%c0_4, %c0_5] : memref<16x64xf32, #tpu.memory_space<vmem>>, vector<16x64xf32>
    %cst = arith.constant dense<0.000000e+00> : vector<16x128xf32>
    %5 = tpu.matmul %4, %0, %cst {dimension_numbers = #tpu.dot_dimension_numbers<[1], [0], [0], [1], [0, 0, 1, 1], [], []>, precision = #tpu.contract_precision<fp32>} : vector<16x64xf32>, vector<64x128xf32>, vector<16x128xf32> -> vector<16x128xf32>
    %6 = arith.addf %5, %1 : vector<16x128xf32>
    %7 = math.tanh %6 : vector<16x128xf32>
    %cst_6 = arith.constant dense<0.000000e+00> : vector<16x128xf32>
    %8 = tpu.matmul %7, %2, %cst_6 {dimension_numbers = #tpu.dot_dimension_numbers<[1], [0], [0], [1], [0, 0, 1, 1], [], []>, precision = #tpu.contract_precision<fp32>} : vector<16x128xf32>, vector<128x128xf32>, vector<16x128xf32> -> vector<16x128xf32>
    %9 = arith.addf %8, %3 : vector<16x128xf32>
    %c0_7 = arith.constant 0 : index
    %c0_8 = arith.constant 0 : index
    %10 = vector.load %arg3[%c0_7, %c0_8] : memref<16x128xf32, #tpu.memory_space<vmem>>, vector<16x128xf32>
    tpu.vector_store %arg3[%c0_7, %c0_8], %9 {strides = array<i32>} : memref<16x128xf32, #tpu.memory_space<vmem>>, vector<16x128xf32>,
    return
  }
  func.func @transform_0(%arg0: i32) -> (i32, i32) {
    %c0_i32 = arith.constant 0 : i32
    %c0_i32_0 = arith.constant 0 : i32
    return %arg0, %c0_i32 : i32, i32
  }
  func.func @transform_1(%arg0: i32) -> (i32, i32) {
    %c0_i32 = arith.constant 0 : i32
    %c0_i32_0 = arith.constant 0 : i32
    %c0_i32_1 = arith.constant 0 : i32
    return %c0_i32, %c0_i32_0 : i32, i32
  }
  func.func @transform_2(%arg0: i32) -> (i32, i32) {
    %c0_i32 = arith.constant 0 : i32
    %c0_i32_0 = arith.constant 0 : i32
    return %arg0, %c0_i32 : i32, i32
  }
}

</mosaic_0001>

<llo_original>
// kernel: rnn_forward.1
$region0: #{rnn_forward.1}
  #allocation0 [shape = 'u32[]', space=smem, size = 0x4, offset = 0x4, fixed_abs, tag = 'smem constant byte address 0x4 - core index']
  #allocation1 [shape = 'u32[144,128]{1,0:T(1,128)}', space=vmem, size = 0x12000, scoped, tag = 'internal scratch']
  %s0 = inlined_call_operand.hbm [shape: f32[16,64], index: 0, kind: input, shape index: {}]
  %s1 = inlined_call_operand.hbm [shape: f32[224,128], index: 1, kind: input, shape index: {}]
  %s2 = inlined_call_operand.vmem [shape: f32[16,128], index: 2, kind: output, shape index: {}]
  %s3 = sld [smem:[#allocation0]]
  $region26: #{rnn_forward.1} parent=0
    _
  %s5 = ssub.s32 1, %s3
  %s6 = scalar_select 0, %s5, %s3
  $region1: #{rnn_forward.1} parent=0
    #allocation2 [shape = 'u8[8192]{0}', space=vmem, size = 0x2000, scoped, tag = 'input window, operand 0, single buffered']
    #allocation3 [shape = 's32[1]{0}', space=sflag, size = 0x4, scoped, tag = 'scoped memory for rnn_forward.1']
    #allocation4 [shape = 'u8[114688]{0}', space=vmem, size = 0x1c000, scoped, tag = 'input window, operand 1, single buffered']
    #allocation5 [shape = 's32[1]{0}', space=sflag, size = 0x4, scoped, tag = 'scoped memory for rnn_forward.1']
    %7 = vsyncpa [#allocation3], 0
    %8 = vsyncpa [#allocation5], 0
    // Predicated region
    $region2: #{rnn_forward.1} parent=1 // pred_check
      _
    $region3: #{rnn_forward.1} parent=1 // pred_check_branch
      %10 = sbr.rel (0) target = $region5
    $region4: #{rnn_forward.1} parent=1 // pred_region
      %s12 = ssub.s32 256, 256
      %13 = vsyncadd [#allocation3], %s12
      %s14 = sshll.u32 [#allocation2], 4
      %s15 = int_to_ptr.vmem [resolvable:$true] %s14
      %20 = dma.hbm_to_vmem [thread:$0]  %s0, 256, %s15, [#allocation3], 128, 128, 8
    $region5: #{rnn_forward.1} parent=1 // pred_fallthru
      _
    // Predicated region
    $region6: #{rnn_forward.1} parent=1 // pred_check
      _
    $region7: #{rnn_forward.1} parent=1 // pred_check_branch
      %22 = sbr.rel (0) target = $region9
    $region8: #{rnn_forward.1} parent=1 // pred_region
      %s24 = ssub.s32 3584, 3584
      %25 = vsyncadd [#allocation5], %s24
      %s26 = sshll.u32 [#allocation4], 4
      %s27 = int_to_ptr.vmem [resolvable:$true] %s26
      %32 = dma.hbm_to_vmem [thread:$0]  %s1, 3584, %s27, [#allocation5], 128, 128, 8
    $region9: #{rnn_forward.1} parent=1 // pred_fallthru
      _
    // Predicated region
    $region10: #{rnn_forward.1} parent=1 // pred_check
      _
    $region11: #{rnn_forward.1} parent=1 // pred_check_branch
      %34 = sbr.rel (0) target = $region13
    $region12: #{rnn_forward.1} parent=1 // pred_region
      %35 = dma.done [#allocation3], 256
    $region13: #{rnn_forward.1} parent=1 // pred_fallthru
      _
    // Predicated region
    $region14: #{rnn_forward.1} parent=1 // pred_check
      _
    $region15: #{rnn_forward.1} parent=1 // pred_check_branch
      %37 = sbr.rel (0) target = $region17
    $region16: #{rnn_forward.1} parent=1 // pred_region
      %38 = dma.done [#allocation5], 3584
    $region17: #{rnn_forward.1} parent=1 // pred_fallthru
      _
    %v39 = vld [vmem:[#allocation4] sm:$0xff]
    %v40 = vld [vmem:[#allocation4 + $0x8] sm:$0xff]
    %v41 = vld [vmem:[#allocation4 + $0x10] sm:$0xff]
    %v42 = vld [vmem:[#allocation4 + $0x18] sm:$0xff]
    %v43 = vld [vmem:[#allocation4 + $0x20] sm:$0xff]
    %v44 = vld [vmem:[#allocation4 + $0x28] sm:$0xff]
    %v45 = vld [vmem:[#allocation4 + $0x30] sm:$0xff]
    %v46 = vld [vmem:[#allocation4 + $0x38] sm:$0xff]
    %v47 = vld [vmem:[#allocation4 + $0x40] sm:$0xff]
    %v48 = vld [vmem:[#allocation4 + $0x48] sm:$0xff]
    %v49 = vld [vmem:[#allocation4 + $0x50] sm:$0xff]
    %v50 = vld [vmem:[#allocation4 + $0x58] sm:$0xff]
    %v51 = vld [vmem:[#allocation4 + $0x60] sm:$0xff]
    %v52 = vld [vmem:[#allocation4 + $0x68] sm:$0xff]
    %v53 = vld [vmem:[#allocation4 + $0x70] sm:$0xff]
    %v54 = vld [vmem:[#allocation4 + $0x78] sm:$0xff]
    %v55 = vld [vmem:[#allocation4 + $0x80] sm:$0xff]
    %v56 = vld [vmem:[#allocation4 + $0x88] sm:$0xff]
    %v57 = vld [vmem:[#allocation4 + $0x90] sm:$0xff]
    %v58 = vld [vmem:[#allocation4 + $0x98] sm:$0xff]
    %v59 = vld [vmem:[#allocation4 + $0xa0] sm:$0xff]
    %v60 = vld [vmem:[#allocation4 + $0xa8] sm:$0xff]
    %v61 = vld [vmem:[#allocation4 + $0xb0] sm:$0xff]
    %v62 = vld [vmem:[#allocation4 + $0xb8] sm:$0xff]
    %v63 = vld [vmem:[#allocation4 + $0xc0] sm:$0xff]
    %v64 = vld [vmem:[#allocation4 + $0xc8] sm:$0xff]
    %v65 = vld [vmem:[#allocation4 + $0xd0] sm:$0xff]
    %v66 = vld [vmem:[#allocation4 + $0xd8] sm:$0xff]
    %v67 = vld [vmem:[#allocation2] sm:$0xff]
    %v68 = vld [vmem:[#allocation2 + $0x8] sm:$0xff]
    %vm69 = vcmask 523264
    %v71 = vsel %vm69, %v67, 0
    %v74 = vsel %vm69, %v68, 0
    %76 = vmatprep.subr.mxu0 0.0
    %v77 = vand.u32 %v39, 4294901760
    %78 = vmatpush1.msra.mxu0 %v77
    %79 = vmatprep.subr.mxu0 0.0
    %v80 = vand.u32 %v40, 4294901760
    %81 = vmatpush1.msra.mxu0 %v80
    %82 = vmatprep.subr.mxu0 0.0
    %v83 = vand.u32 %v41, 4294901760
    %84 = vmatpush1.msra.mxu0 %v83
    %85 = vmatprep.subr.mxu0 0.0
    %v86 = vand.u32 %v42, 4294901760
    %87 = vmatpush1.msra.mxu0 %v86
    %88 = vmatprep.subr.mxu0 0.0
    %v89 = vand.u32 %v43, 4294901760
    %90 = vmatpush1.msra.mxu0 %v89
    %91 = vmatprep.subr.mxu0 0.0
    %v92 = vand.u32 %v44, 4294901760
    %93 = vmatpush1.msra.mxu0 %v92
    %94 = vmatprep.subr.mxu0 0.0
    %v95 = vand.u32 %v45, 4294901760
    %96 = vmatpush1.msra.mxu0 %v95
    %97 = vmatprep.subr.mxu0 0.0
    %v98 = vand.u32 %v46, 4294901760
    %99 = vmatpush1.msra.mxu0 %v98
    %100 = vmatprep.subr.mxu0 0.0
    %101 = vmatpush1.msra.mxu0 0.0
    %102 = vmatprep.subr.mxu0 0.0
    %103 = vmatpush1.msra.mxu0 0.0
    %104 = vmatprep.subr.mxu0 0.0
    %105 = vmatpush1.msra.mxu0 0.0
    %106 = vmatprep.subr.mxu0 0.0
    %107 = vmatpush1.msra.mxu0 0.0
    %108 = vmatprep.subr.mxu0 0.0
    %109 = vmatpush1.msra.mxu0 0.0
    %110 = vmatprep.subr.mxu0 0.0
    %111 = vmatpush1.msra.mxu0 0.0
    %112 = vmatprep.subr.mxu0 0.0
    %113 = vmatpush1.msra.mxu0 0.0
    %114 = vmatprep.subr.mxu0 0.0
    %115 = vmatpush1.msra.mxu0 0.0
    %116 = vmatprep.subr.mxu0 0.0
    %117 = vmatpush1.msra.mxu0 0.0
    %118 = vmatprep.subr.mxu0 0.0
    %119 = vmatpush1.msra.mxu0 0.0
    %120 = vmatprep.subr.mxu0 0.0
    %121 = vmatpush1.msra.mxu0 0.0
    %122 = vmatprep.subr.mxu0 0.0
    %123 = vmatpush1.msra.mxu0 0.0
    %124 = vmatprep.subr.mxu0 0.0
    %125 = vmatpush1.msra.mxu0 0.0
    %126 = vmatprep.subr.mxu0 0.0
    %127 = vmatpush1.msra.mxu0 0.0
    %128 = vmatprep.subr.mxu0 0.0
    %129 = vmatpush1.msra.mxu0 0.0
    %130 = vmatprep.subr.mxu0 0.0
    %131 = vmatpush1.msra.mxu0 0.0
    %132 = vmatprep.subr.mxu0 0.0
    %133 = vmatpush1.msra.mxu0 0.0
    %134 = vmatprep.subr.mxu0 0.0
    %135 = vmatpush1.msra.mxu0 0.0
    %136 = vmatprep.subr.mxu0 0.0
    %137 = vmatpush1.msra.mxu0 0.0
    %138 = vmatprep.subr.mxu0 0.0
    %139 = vmatpush1.msra.mxu0 0.0
    %140 = vmatprep.subr.mxu0 0.0
    %141 = vmatpush1.msra.mxu0 0.0
    %142 = vmatprep.subr.mxu0 0.0
    %143 = vmatpush1.msra.mxu0 0.0
    %144 = vmatprep.subr.mxu0 0.0
    %145 = vmatpush1.msra.mxu0 0.0
    %146 = vmatprep.subr.mxu0 0.0
    %147 = vmatpush1.msra.mxu0 0.0
    %148 = vmatprep.mubr.f32.mxu0 0.0
    %v149 = vand.u32 %v71, 4294901760
    %v150 = vsub.f32 %v71, %v149
    %v151 = vand.u32 %v150, 4294901760
    %v152 = vsub.f32 %v150, %v151
    %v153 = vand.u32 %v152, 4294901760
    %154 = vmatmul.mubr.f32.gmra.mrb[0].mxu0 %v153
    %v155 = vpop.f32.mrb[0].mxu0
    %v156 = vadd.f32 %v47, %v155
    %v157 = vpop.f32.mrb[0].mxu0
    %158 = vmatprep.mubr.f32.mxu0 0.0
    %v159 = vand.u32 %v74, 4294901760
    %v160 = vsub.f32 %v74, %v159
    %v161 = vand.u32 %v160, 4294901760
    %v162 = vsub.f32 %v160, %v161
    %v163 = vand.u32 %v162, 4294901760
    %164 = vmatmul.mubr.f32.gmra.mrb[0].mxu0 %v163
    %v165 = vpop.f32.mrb[0].mxu0
    %v166 = vadd.f32 %v48, %v165
    %v167 = vpop.f32.mrb[0].mxu0
    %168 = vdwg.mxu0
    %169 = vmatprep.subr.mxu0 0.0
    %v170 = vand.u32 %v39, 4294901760
    %v171 = vsub.f32 %v39, %v170
    %v172 = vand.u32 %v171, 4294901760
    %v173 = vsub.f32 %v171, %v172
    %v174 = vand.u32 %v173, 4294901760
    %175 = vmatpush1.msra.mxu0 %v174
    %176 = vmatprep.subr.mxu0 0.0
    %v177 = vand.u32 %v40, 4294901760
    %v178 = vsub.f32 %v40, %v177
    %v179 = vand.u32 %v178, 4294901760
    %v180 = vsub.f32 %v178, %v179
    %v181 = vand.u32 %v180, 4294901760
    %182 = vmatpush1.msra.mxu0 %v181
    %183 = vmatprep.subr.mxu0 0.0
    %v184 = vand.u32 %v41, 4294901760
    %v185 = vsub.f32 %v41, %v184
    %v186 = vand.u32 %v185, 4294901760
    %v187 = vsub.f32 %v185, %v186
    %v188 = vand.u32 %v187, 4294901760
    %189 = vmatpush1.msra.mxu0 %v188
    %190 = vmatprep.subr.mxu0 0.0
    %v191 = vand.u32 %v42, 4294901760
    %v192 = vsub.f32 %v42, %v191
    %v193 = vand.u32 %v192, 4294901760
    %v194 = vsub.f32 %v192, %v193
    %v195 = vand.u32 %v194, 4294901760
    %196 = vmatpush1.msra.mxu0 %v195
    %197 = vmatprep.subr.mxu0 0.0
    %v198 = vand.u32 %v43, 4294901760
    %v199 = vsub.f32 %v43, %v198
    %v200 = vand.u32 %v199, 4294901760
    %v201 = vsub.f32 %v199, %v200
    %v202 = vand.u32 %v201, 4294901760
    %203 = vmatpush1.msra.mxu0 %v202
    %204 = vmatprep.subr.mxu0 0.0
    %v205 = vand.u32 %v44, 4294901760
    %v206 = vsub.f32 %v44, %v205
    %v207 = vand.u32 %v206, 4294901760
    %v208 = vsub.f32 %v206, %v207
    %v209 = vand.u32 %v208, 4294901760
    %210 = vmatpush1.msra.mxu0 %v209
    %211 = vmatprep.subr.mxu0 0.0
    %v212 = vand.u32 %v45, 4294901760
    %v213 = vsub.f32 %v45, %v212
    %v214 = vand.u32 %v213, 4294901760
    %v215 = vsub.f32 %v213, %v214
    %v216 = vand.u32 %v215, 4294901760
    %217 = vmatpush1.msra.mxu0 %v216
    %218 = vmatprep.subr.mxu0 0.0
    %v219 = vand.u32 %v46, 4294901760
    %v220 = vsub.f32 %v46, %v219
    %v221 = vand.u32 %v220, 4294901760
    %v222 = vsub.f32 %v220, %v221
    %v223 = vand.u32 %v222, 4294901760
    %224 = vmatpush1.msra.mxu0 %v223
    %225 = vmatprep.subr.mxu0 0.0
    %226 = vmatpush1.msra.mxu0 0.0
    %227 = vmatprep.subr.mxu0 0.0
    %228 = vmatpush1.msra.mxu0 0.0
    %229 = vmatprep.subr.mxu0 0.0
    %230 = vmatpush1.msra.mxu0 0.0
    %231 = vmatprep.subr.mxu0 0.0
    %232 = vmatpush1.msra.mxu0 0.0
    %233 = vmatprep.subr.mxu0 0.0
    %234 = vmatpush1.msra.mxu0 0.0
    %235 = vmatprep.subr.mxu0 0.0
    %236 = vmatpush1.msra.mxu0 0.0
    %237 = vmatprep.subr.mxu0 0.0
    %238 = vmatpush1.msra.mxu0 0.0
    %239 = vmatprep.subr.mxu0 0.0
    %240 = vmatpush1.msra.mxu0 0.0
    %241 = vmatprep.subr.mxu0 0.0
    %242 = vmatpush1.msra.mxu0 0.0
    %243 = vmatprep.subr.mxu0 0.0
    %244 = vmatpush1.msra.mxu0 0.0
    %245 = vmatprep.subr.mxu0 0.0
    %246 = vmatpush1.msra.mxu0 0.0
    %247 = vmatprep.subr.mxu0 0.0
    %248 = vmatpush1.msra.mxu0 0.0
    %249 = vmatprep.subr.mxu0 0.0
    %250 = vmatpush1.msra.mxu0 0.0
    %251 = vmatprep.subr.mxu0 0.0
    %252 = vmatpush1.msra.mxu0 0.0
    %253 = vmatprep.subr.mxu0 0.0
    %254 = vmatpush1.msra.mxu0 0.0
    %255 = vmatprep.subr.mxu0 0.0
    %256 = vmatpush1.msra.mxu0 0.0
    %257 = vmatprep.subr.mxu0 0.0
    %258 = vmatpush1.msra.mxu0 0.0
    %259 = vmatprep.subr.mxu0 0.0
    %260 = vmatpush1.msra.mxu0 0.0
    %261 = vmatprep.subr.mxu0 0.0
    %262 = vmatpush1.msra.mxu0 0.0
    %263 = vmatprep.subr.mxu0 0.0
    %264 = vmatpush1.msra.mxu0 0.0
    %265 = vmatprep.subr.mxu0 0.0
    %266 = vmatpush1.msra.mxu0 0.0
    %267 = vmatprep.subr.mxu0 0.0
    %268 = vmatpush1.msra.mxu0 0.0
    %269 = vmatprep.subr.mxu0 0.0
    %270 = vmatpush1.msra.mxu0 0.0
    %271 = vmatprep.subr.mxu0 0.0
    %272 = vmatpush1.msra.mxu0 0.0
    %273 = vmatprep.mubr.f32.mxu0 0.0
    %v274 = vand.u32 %v71, 4294901760
    %275 = vmatmul.mubr.f32.gmra.mrb[0].mxu0 %v274
    %v276 = vpop.f32.mrb[0].mxu0
    %v277 = vadd.f32 %v156, %v276
    %v278 = vpop.f32.mrb[0].mxu0
    %279 = vmatprep.mubr.f32.mxu0 0.0
    %v280 = vand.u32 %v74, 4294901760
    %281 = vmatmul.mubr.f32.gmra.mrb[0].mxu0 %v280
    %v282 = vpop.f32.mrb[0].mxu0
    %v283 = vadd.f32 %v166, %v282
    %v284 = vpop.f32.mrb[0].mxu0
    %285 = vdwg.mxu0
    %286 = vmatprep.subr.mxu0 0.0
    %v287 = vand.u32 %v39, 4294901760
    %v288 = vsub.f32 %v39, %v287
    %289 = vmatpush1.msra.mxu0 %v288
    %290 = vmatprep.subr.mxu0 0.0
    %v291 = vand.u32 %v40, 4294901760
    %v292 = vsub.f32 %v40, %v291
    %293 = vmatpush1.msra.mxu0 %v292
    %294 = vmatprep.subr.mxu0 0.0
    %v295 = vand.u32 %v41, 4294901760
    %v296 = vsub.f32 %v41, %v295
    %297 = vmatpush1.msra.mxu0 %v296
    %298 = vmatprep.subr.mxu0 0.0
    %v299 = vand.u32 %v42, 4294901760
    %v300 = vsub.f32 %v42, %v299
    %301 = vmatpush1.msra.mxu0 %v300
    %302 = vmatprep.subr.mxu0 0.0
    %v303 = vand.u32 %v43, 4294901760
    %v304 = vsub.f32 %v43, %v303
    %305 = vmatpush1.msra.mxu0 %v304
    %306 = vmatprep.subr.mxu0 0.0
    %v307 = vand.u32 %v44, 4294901760
    %v308 = vsub.f32 %v44, %v307
    %309 = vmatpush1.msra.mxu0 %v308
    %310 = vmatprep.subr.mxu0 0.0
    %v311 = vand.u32 %v45, 4294901760
    %v312 = vsub.f32 %v45, %v311
    %313 = vmatpush1.msra.mxu0 %v312
    %314 = vmatprep.subr.mxu0 0.0
    %v315 = vand.u32 %v46, 4294901760
    %v316 = vsub.f32 %v46, %v315
    %317 = vmatpush1.msra.mxu0 %v316
    %318 = vmatprep.subr.mxu0 0.0
    %319 = vmatpush1.msra.mxu0 0.0
    %320 = vmatprep.subr.mxu0 0.0
    %321 = vmatpush1.msra.mxu0 0.0
    %322 = vmatprep.subr.mxu0 0.0
    %323 = vmatpush1.msra.mxu0 0.0
    %324 = vmatprep.subr.mxu0 0.0
    %325 = vmatpush1.msra.mxu0 0.0
    %326 = vmatprep.subr.mxu0 0.0
    %327 = vmatpush1.msra.mxu0 0.0
    %328 = vmatprep.subr.mxu0 0.0
    %329 = vmatpush1.msra.mxu0 0.0
    %330 = vmatprep.subr.mxu0 0.0
    %331 = vmatpush1.msra.mxu0 0.0
    %332 = vmatprep.subr.mxu0 0.0
    %333 = vmatpush1.msra.mxu0 0.0
    %334 = vmatprep.subr.mxu0 0.0
    %335 = vmatpush1.msra.mxu0 0.0
    %336 = vmatprep.subr.mxu0 0.0
    %337 = vmatpush1.msra.mxu0 0.0
    %338 = vmatprep.subr.mxu0 0.0
    %339 = vmatpush1.msra.mxu0 0.0
    %340 = vmatprep.subr.mxu0 0.0
    %341 = vmatpush1.msra.mxu0 0.0
    %342 = vmatprep.subr.mxu0 0.0
    %343 = vmatpush1.msra.mxu0 0.0
    %344 = vmatprep.subr.mxu0 0.0
    %345 = vmatpush1.msra.mxu0 0.0
    %346 = vmatprep.subr.mxu0 0.0
    %347 = vmatpush1.msra.mxu0 0.0
    %348 = vmatprep.subr.mxu0 0.0
    %349 = vmatpush1.msra.mxu0 0.0
    %350 = vmatprep.subr.mxu0 0.0
    %351 = vmatpush1.msra.mxu0 0.0
    %352 = vmatprep.subr.mxu0 0.0
    %353 = vmatpush1.msra.mxu0 0.0
    %354 = vmatprep.subr.mxu0 0.0
    %355 = vmatpush1.msra.mxu0 0.0
    %356 = vmatprep.subr.mxu0 0.0
    %357 = vmatpush1.msra.mxu0 0.0
    %358 = vmatprep.subr.mxu0 0.0
    %359 = vmatpush1.msra.mxu0 0.0
    %360 = vmatprep.subr.mxu0 0.0
    %361 = vmatpush1.msra.mxu0 0.0
    %362 = vmatprep.subr.mxu0 0.0
    %363 = vmatpush1.msra.mxu0 0.0
    %364 = vmatprep.subr.mxu0 0.0
    %365 = vmatpush1.msra.mxu0 0.0
    %366 = vmatprep.mubr.f32.mxu0 0.0
    %v367 = vand.u32 %v71, 4294901760
    %v368 = vsub.f32 %v71, %v367
    %369 = vmatmul.mubr.f32.gmra.mrb[0].mxu0 %v368
    %v370 = vpop.f32.mrb[0].mxu0
    %v371 = vadd.f32 %v277, %v370
    %v372 = vpop.f32.mrb[0].mxu0
    %373 = vmatprep.mubr.f32.mxu0 0.0
    %v374 = vand.u32 %v74, 4294901760
    %v375 = vsub.f32 %v74, %v374
    %376 = vmatmul.mubr.f32.gmra.mrb[0].mxu0 %v375
    %v377 = vpop.f32.mrb[0].mxu0
    %v378 = vadd.f32 %v283, %v377
    %v379 = vpop.f32.mrb[0].mxu0
    %380 = vdwg.mxu0
    %381 = vmatprep.subr.mxu0 0.0
    %v382 = vand.u32 %v39, 4294901760
    %383 = vmatpush1.msra.mxu0 %v382
    %384 = vmatprep.subr.mxu0 0.0
    %v385 = vand.u32 %v40, 4294901760
    %386 = vmatpush1.msra.mxu0 %v385
    %387 = vmatprep.subr.mxu0 0.0
    %v388 = vand.u32 %v41, 4294901760
    %389 = vmatpush1.msra.mxu0 %v388
    %390 = vmatprep.subr.mxu0 0.0
    %v391 = vand.u32 %v42, 4294901760
    %392 = vmatpush1.msra.mxu0 %v391
    %393 = vmatprep.subr.mxu0 0.0
    %v394 = vand.u32 %v43, 4294901760
    %395 = vmatpush1.msra.mxu0 %v394
    %396 = vmatprep.subr.mxu0 0.0
    %v397 = vand.u32 %v44, 4294901760
    %398 = vmatpush1.msra.mxu0 %v397
    %399 = vmatprep.subr.mxu0 0.0
    %v400 = vand.u32 %v45, 4294901760
    %401 = vmatpush1.msra.mxu0 %v400
    %402 = vmatprep.subr.mxu0 0.0
    %v403 = vand.u32 %v46, 4294901760
    %404 = vmatpush1.msra.mxu0 %v403
    %405 = vmatprep.subr.mxu0 0.0
    %406 = vmatpush1.msra.mxu0 0.0
    %407 = vmatprep.subr.mxu0 0.0
    %408 = vmatpush1.msra.mxu0 0.0
    %409 = vmatprep.subr.mxu0 0.0
    %410 = vmatpush1.msra.mxu0 0.0
    %411 = vmatprep.subr.mxu0 0.0
    %412 = vmatpush1.msra.mxu0 0.0
    %413 = vmatprep.subr.mxu0 0.0
    %414 = vmatpush1.msra.mxu0 0.0
    %415 = vmatprep.subr.mxu0 0.0
    %416 = vmatpush1.msra.mxu0 0.0
    %417 = vmatprep.subr.mxu0 0.0
    %418 = vmatpush1.msra.mxu0 0.0
    %419 = vmatprep.subr.mxu0 0.0
    %420 = vmatpush1.msra.mxu0 0.0
    %421 = vmatprep.subr.mxu0 0.0
    %422 = vmatpush1.msra.mxu0 0.0
    %423 = vmatprep.subr.mxu0 0.0
    %424 = vmatpush1.msra.mxu0 0.0
    %425 = vmatprep.subr.mxu0 0.0
    %426 = vmatpush1.msra.mxu0 0.0
    %427 = vmatprep.subr.mxu0 0.0
    %428 = vmatpush1.msra.mxu0 0.0
    %429 = vmatprep.subr.mxu0 0.0
    %430 = vmatpush1.msra.mxu0 0.0
    %431 = vmatprep.subr.mxu0 0.0
    %432 = vmatpush1.msra.mxu0 0.0
    %433 = vmatprep.subr.mxu0 0.0
    %434 = vmatpush1.msra.mxu0 0.0
    %435 = vmatprep.subr.mxu0 0.0
    %436 = vmatpush1.msra.mxu0 0.0
    %437 = vmatprep.subr.mxu0 0.0
    %438 = vmatpush1.msra.mxu0 0.0
    %439 = vmatprep.subr.mxu0 0.0
    %440 = vmatpush1.msra.mxu0 0.0
    %441 = vmatprep.subr.mxu0 0.0
    %442 = vmatpush1.msra.mxu0 0.0
    %443 = vmatprep.subr.mxu0 0.0
    %444 = vmatpush1.msra.mxu0 0.0
    %445 = vmatprep.subr.mxu0 0.0
    %446 = vmatpush1.msra.mxu0 0.0
    %447 = vmatprep.subr.mxu0 0.0
    %448 = vmatpush1.msra.mxu0 0.0
    %449 = vmatprep.subr.mxu0 0.0
    %450 = vmatpush1.msra.mxu0 0.0
    %451 = vmatprep.subr.mxu0 0.0
    %452 = vmatpush1.msra.mxu0 0.0
    %453 = vmatprep.mubr.f32.mxu0 0.0
    %v454 = vand.u32 %v71, 4294901760
    %v455 = vsub.f32 %v71, %v454
    %v456 = vand.u32 %v455, 4294901760
    %457 = vmatmul.mubr.f32.gmra.mrb[0].mxu0 %v456
    %v458 = vpop.f32.mrb[0].mxu0
    %v459 = vadd.f32 %v371, %v458
    %v460 = vpop.f32.mrb[0].mxu0
    %461 = vmatprep.mubr.f32.mxu0 0.0
    %v462 = vand.u32 %v74, 4294901760
    %v463 = vsub.f32 %v74, %v462
    %v464 = vand.u32 %v463, 4294901760
    %465 = vmatmul.mubr.f32.gmra.mrb[0].mxu0 %v464
    %v466 = vpop.f32.mrb[0].mxu0
    %v467 = vadd.f32 %v378, %v466
    %v468 = vpop.f32.mrb[0].mxu0
    %469 = vdwg.mxu0
    %470 = vmatprep.subr.mxu0 0.0
    %v471 = vand.u32 %v39, 4294901760
    %v472 = vsub.f32 %v39, %v471
    %v473 = vand.u32 %v472, 4294901760
    %474 = vmatpush1.msra.mxu0 %v473
    %475 = vmatprep.subr.mxu0 0.0
    %v476 = vand.u32 %v40, 4294901760
    %v477 = vsub.f32 %v40, %v476
    %v478 = vand.u32 %v477, 4294901760
    %479 = vmatpush1.msra.mxu0 %v478
    %480 = vmatprep.subr.mxu0 0.0
    %v481 = vand.u32 %v41, 4294901760
    %v482 = vsub.f32 %v41, %v481
    %v483 = vand.u32 %v482, 4294901760
    %484 = vmatpush1.msra.mxu0 %v483
    %485 = vmatprep.subr.mxu0 0.0
    %v486 = vand.u32 %v42, 4294901760
    %v487 = vsub.f32 %v42, %v486
    %v488 = vand.u32 %v487, 4294901760
    %489 = vmatpush1.msra.mxu0 %v488
    %490 = vmatprep.subr.mxu0 0.0
    %v491 = vand.u32 %v43, 4294901760
    %v492 = vsub.f32 %v43, %v491
    %v493 = vand.u32 %v492, 4294901760
    %494 = vmatpush1.msra.mxu0 %v493
    %495 = vmatprep.subr.mxu0 0.0
    %v496 = vand.u32 %v44, 4294901760
    %v497 = vsub.f32 %v44, %v496
    %v498 = vand.u32 %v497, 4294901760
    %499 = vmatpush1.msra.mxu0 %v498
    %500 = vmatprep.subr.mxu0 0.0
    %v501 = vand.u32 %v45, 4294901760
    %v502 = vsub.f32 %v45, %v501
    %v503 = vand.u32 %v502, 4294901760
    %504 = vmatpush1.msra.mxu0 %v503
    %505 = vmatprep.subr.mxu0 0.0
    %v506 = vand.u32 %v46, 4294901760
    %v507 = vsub.f32 %v46, %v506
    %v508 = vand.u32 %v507, 4294901760
    %509 = vmatpush1.msra.mxu0 %v508
    %510 = vmatprep.subr.mxu0 0.0
    %511 = vmatpush1.msra.mxu0 0.0
    %512 = vmatprep.subr.mxu0 0.0
    %513 = vmatpush1.msra.mxu0 0.0
    %514 = vmatprep.subr.mxu0 0.0
    %515 = vmatpush1.msra.mxu0 0.0
    %516 = vmatprep.subr.mxu0 0.0
    %517 = vmatpush1.msra.mxu0 0.0
    %518 = vmatprep.subr.mxu0 0.0
    %519 = vmatpush1.msra.mxu0 0.0
    %520 = vmatprep.subr.mxu0 0.0
    %521 = vmatpush1.msra.mxu0 0.0
    %522 = vmatprep.subr.mxu0 0.0
    %523 = vmatpush1.msra.mxu0 0.0
    %524 = vmatprep.subr.mxu0 0.0
    %525 = vmatpush1.msra.mxu0 0.0
    %526 = vmatprep.subr.mxu0 0.0
    %527 = vmatpush1.msra.mxu0 0.0
    %528 = vmatprep.subr.mxu0 0.0
    %529 = vmatpush1.msra.mxu0 0.0
    %530 = vmatprep.subr.mxu0 0.0
    %531 = vmatpush1.msra.mxu0 0.0
    %532 = vmatprep.subr.mxu0 0.0
    %533 = vmatpush1.msra.mxu0 0.0
    %534 = vmatprep.subr.mxu0 0.0
    %535 = vmatpush1.msra.mxu0 0.0
    %536 = vmatprep.subr.mxu0 0.0
    %537 = vmatpush1.msra.mxu0 0.0
    %538 = vmatprep.subr.mxu0 0.0
    %539 = vmatpush1.msra.mxu0 0.0
    %540 = vmatprep.subr.mxu0 0.0
    %541 = vmatpush1.msra.mxu0 0.0
    %542 = vmatprep.subr.mxu0 0.0
    %543 = vmatpush1.msra.mxu0 0.0
    %544 = vmatprep.subr.mxu0 0.0
    %545 = vmatpush1.msra.mxu0 0.0
    %546 = vmatprep.subr.mxu0 0.0
    %547 = vmatpush1.msra.mxu0 0.0
    %548 = vmatprep.subr.mxu0 0.0
    %549 = vmatpush1.msra.mxu0 0.0
    %550 = vmatprep.subr.mxu0 0.0
    %551 = vmatpush1.msra.mxu0 0.0
    %552 = vmatprep.subr.mxu0 0.0
    %553 = vmatpush1.msra.mxu0 0.0
    %554 = vmatprep.subr.mxu0 0.0
    %555 = vmatpush1.msra.mxu0 0.0
    %556 = vmatprep.subr.mxu0 0.0
    %557 = vmatpush1.msra.mxu0 0.0
    %558 = vmatprep.mubr.f32.mxu0 0.0
    %v559 = vand.u32 %v71, 4294901760
    %560 = vmatmul.mubr.f32.gmra.mrb[0].mxu0 %v559
    %v561 = vpop.f32.mrb[0].mxu0
    %v562 = vadd.f32 %v459, %v561
    %v563 = vpop.f32.mrb[0].mxu0
    %564 = vmatprep.mubr.f32.mxu0 0.0
    %v565 = vand.u32 %v74, 4294901760
    %566 = vmatmul.mubr.f32.gmra.mrb[0].mxu0 %v565
    %v567 = vpop.f32.mrb[0].mxu0
    %v568 = vadd.f32 %v467, %v567
    %v569 = vpop.f32.mrb[0].mxu0
    %570 = vdwg.mxu0
    %571 = vmatprep.subr.mxu0 0.0
    %v572 = vand.u32 %v39, 4294901760
    %573 = vmatpush1.msra.mxu0 %v572
    %574 = vmatprep.subr.mxu0 0.0
    %v575 = vand.u32 %v40, 4294901760
    %576 = vmatpush1.msra.mxu0 %v575
    %577 = vmatprep.subr.mxu0 0.0
    %v578 = vand.u32 %v41, 4294901760
    %579 = vmatpush1.msra.mxu0 %v578
    %580 = vmatprep.subr.mxu0 0.0
    %v581 = vand.u32 %v42, 4294901760
    %582 = vmatpush1.msra.mxu0 %v581
    %583 = vmatprep.subr.mxu0 0.0
    %v584 = vand.u32 %v43, 4294901760
    %585 = vmatpush1.msra.mxu0 %v584
    %586 = vmatprep.subr.mxu0 0.0
    %v587 = vand.u32 %v44, 4294901760
    %588 = vmatpush1.msra.mxu0 %v587
    %589 = vmatprep.subr.mxu0 0.0
    %v590 = vand.u32 %v45, 4294901760
    %591 = vmatpush1.msra.mxu0 %v590
    %592 = vmatprep.subr.mxu0 0.0
    %v593 = vand.u32 %v46, 4294901760
    %594 = vmatpush1.msra.mxu0 %v593
    %595 = vmatprep.subr.mxu0 0.0
    %596 = vmatpush1.msra.mxu0 0.0
    %597 = vmatprep.subr.mxu0 0.0
    %598 = vmatpush1.msra.mxu0 0.0
    %599 = vmatprep.subr.mxu0 0.0
    %600 = vmatpush1.msra.mxu0 0.0
    %601 = vmatprep.subr.mxu0 0.0
    %602 = vmatpush1.msra.mxu0 0.0
    %603 = vmatprep.subr.mxu0 0.0
    %604 = vmatpush1.msra.mxu0 0.0
    %605 = vmatprep.subr.mxu0 0.0
    %606 = vmatpush1.msra.mxu0 0.0
    %607 = vmatprep.subr.mxu0 0.0
    %608 = vmatpush1.msra.mxu0 0.0
    %609 = vmatprep.subr.mxu0 0.0
    %610 = vmatpush1.msra.mxu0 0.0
    %611 = vmatprep.subr.mxu0 0.0
    %612 = vmatpush1.msra.mxu0 0.0
    %613 = vmatprep.subr.mxu0 0.0
    %614 = vmatpush1.msra.mxu0 0.0
    %615 = vmatprep.subr.mxu0 0.0
    %616 = vmatpush1.msra.mxu0 0.0
    %617 = vmatprep.subr.mxu0 0.0
    %618 = vmatpush1.msra.mxu0 0.0
    %619 = vmatprep.subr.mxu0 0.0
    %620 = vmatpush1.msra.mxu0 0.0
    %621 = vmatprep.subr.mxu0 0.0
    %622 = vmatpush1.msra.mxu0 0.0
    %623 = vmatprep.subr.mxu0 0.0
    %624 = vmatpush1.msra.mxu0 0.0
    %625 = vmatprep.subr.mxu0 0.0
    %626 = vmatpush1.msra.mxu0 0.0
    %627 = vmatprep.subr.mxu0 0.0
    %628 = vmatpush1.msra.mxu0 0.0
    %629 = vmatprep.subr.mxu0 0.0
    %630 = vmatpush1.msra.mxu0 0.0
    %631 = vmatprep.subr.mxu0 0.0
    %632 = vmatpush1.msra.mxu0 0.0
    %633 = vmatprep.subr.mxu0 0.0
    %634 = vmatpush1.msra.mxu0 0.0
    %635 = vmatprep.subr.mxu0 0.0
    %636 = vmatpush1.msra.mxu0 0.0
    %637 = vmatprep.subr.mxu0 0.0
    %638 = vmatpush1.msra.mxu0 0.0
    %639 = vmatprep.subr.mxu0 0.0
    %640 = vmatpush1.msra.mxu0 0.0
    %641 = vmatprep.subr.mxu0 0.0
    %642 = vmatpush1.msra.mxu0 0.0
    %643 = vmatprep.mubr.f32.mxu0 0.0
    %v644 = vand.u32 %v71, 4294901760
    %645 = vmatmul.mubr.f32.gmra.mrb[0].mxu0 %v644
    %v646 = vpop.f32.mrb[0].mxu0
    %v647 = vadd.f32 %v562, %v646
    %v648 = vpop.f32.mrb[0].mxu0
    %649 = vmatprep.mubr.f32.mxu0 0.0
    %v650 = vand.u32 %v74, 4294901760
    %651 = vmatmul.mubr.f32.gmra.mrb[0].mxu0 %v650
    %v652 = vpop.f32.mrb[0].mxu0
    %v653 = vadd.f32 %v568, %v652
    %v654 = vpop.f32.mrb[0].mxu0
    %655 = vdwg.mxu0
    %v656 = vtanh.pop %v647
    %v657 = vtanh.pop %v653
    %658 = vmatprep.subr.mxu0 0.0
    %v659 = vand.u32 %v49, 4294901760
    %660 = vmatpush1.msra.mxu0 %v659
    %661 = vmatprep.subr.mxu0 0.0
    %v662 = vand.u32 %v50, 4294901760
    %663 = vmatpush1.msra.mxu0 %v662
    %664 = vmatprep.subr.mxu0 0.0
    %v665 = vand.u32 %v51, 4294901760
    %666 = vmatpush1.msra.mxu0 %v665
    %667 = vmatprep.subr.mxu0 0.0
    %v668 = vand.u32 %v52, 4294901760
    %669 = vmatpush1.msra.mxu0 %v668
    %670 = vmatprep.subr.mxu0 0.0
    %v671 = vand.u32 %v53, 4294901760
    %672 = vmatpush1.msra.mxu0 %v671
    %673 = vmatprep.subr.mxu0 0.0
    %v674 = vand.u32 %v54, 4294901760
    %675 = vmatpush1.msra.mxu0 %v674
    %676 = vmatprep.subr.mxu0 0.0
    %v677 = vand.u32 %v55, 4294901760
    %678 = vmatpush1.msra.mxu0 %v677
    %679 = vmatprep.subr.mxu0 0.0
    %v680 = vand.u32 %v56, 4294901760
    %681 = vmatpush1.msra.mxu0 %v680
    %682 = vmatprep.subr.mxu0 0.0
    %v683 = vand.u32 %v57, 4294901760
    %684 = vmatpush1.msra.mxu0 %v683
    %685 = vmatprep.subr.mxu0 0.0
    %v686 = vand.u32 %v58, 4294901760
    %687 = vmatpush1.msra.mxu0 %v686
    %688 = vmatprep.subr.mxu0 0.0
    %v689 = vand.u32 %v59, 4294901760
    %690 = vmatpush1.msra.mxu0 %v689
    %691 = vmatprep.subr.mxu0 0.0
    %v692 = vand.u32 %v60, 4294901760
    %693 = vmatpush1.msra.mxu0 %v692
    %694 = vmatprep.subr.mxu0 0.0
    %v695 = vand.u32 %v61, 4294901760
    %696 = vmatpush1.msra.mxu0 %v695
    %697 = vmatprep.subr.mxu0 0.0
    %v698 = vand.u32 %v62, 4294901760
    %699 = vmatpush1.msra.mxu0 %v698
    %700 = vmatprep.subr.mxu0 0.0
    %v701 = vand.u32 %v63, 4294901760
    %702 = vmatpush1.msra.mxu0 %v701
    %703 = vmatprep.subr.mxu0 0.0
    %v704 = vand.u32 %v64, 4294901760
    %705 = vmatpush1.msra.mxu0 %v704
    %706 = vmatprep.subr.mxu0 0.0
    %707 = vmatpush1.msra.mxu0 0.0
    %708 = vmatprep.subr.mxu0 0.0
    %709 = vmatpush1.msra.mxu0 0.0
    %710 = vmatprep.subr.mxu0 0.0
    %711 = vmatpush1.msra.mxu0 0.0
    %712 = vmatprep.subr.mxu0 0.0
    %713 = vmatpush1.msra.mxu0 0.0
    %714 = vmatprep.subr.mxu0 0.0
    %715 = vmatpush1.msra.mxu0 0.0
    %716 = vmatprep.subr.mxu0 0.0
    %717 = vmatpush1.msra.mxu0 0.0
    %718 = vmatprep.subr.mxu0 0.0
    %719 = vmatpush1.msra.mxu0 0.0
    %720 = vmatprep.subr.mxu0 0.0
    %721 = vmatpush1.msra.mxu0 0.0
    %722 = vmatprep.subr.mxu0 0.0
    %723 = vmatpush1.msra.mxu0 0.0
    %724 = vmatprep.subr.mxu0 0.0
    %725 = vmatpush1.msra.mxu0 0.0
    %726 = vmatprep.subr.mxu0 0.0
    %727 = vmatpush1.msra.mxu0 0.0
    %728 = vmatprep.subr.mxu0 0.0
    %729 = vmatpush1.msra.mxu0 0.0
    %730 = vmatprep.subr.mxu0 0.0
    %731 = vmatpush1.msra.mxu0 0.0
    %732 = vmatprep.subr.mxu0 0.0
    %733 = vmatpush1.msra.mxu0 0.0
    %734 = vmatprep.subr.mxu0 0.0
    %735 = vmatpush1.msra.mxu0 0.0
    %736 = vmatprep.subr.mxu0 0.0
    %737 = vmatpush1.msra.mxu0 0.0
    %738 = vmatprep.mubr.f32.mxu0 0.0
    %v739 = vand.u32 %v656, 4294901760
    %v740 = vsub.f32 %v656, %v739
    %v741 = vand.u32 %v740, 4294901760
    %v742 = vsub.f32 %v740, %v741
    %v743 = vand.u32 %v742, 4294901760
    %744 = vmatmul.mubr.f32.gmra.mrb[0].mxu0 %v743
    %v745 = vpop.f32.mrb[0].mxu0
    %v746 = vadd.f32 %v65, %v745
    %v747 = vpop.f32.mrb[0].mxu0
    %748 = vmatprep.mubr.f32.mxu0 0.0
    %v749 = vand.u32 %v657, 4294901760
    %v750 = vsub.f32 %v657, %v749
    %v751 = vand.u32 %v750, 4294901760
    %v752 = vsub.f32 %v750, %v751
    %v753 = vand.u32 %v752, 4294901760
    %754 = vmatmul.mubr.f32.gmra.mrb[0].mxu0 %v753
    %v755 = vpop.f32.mrb[0].mxu0
    %v756 = vadd.f32 %v66, %v755
    %v757 = vpop.f32.mrb[0].mxu0
    %758 = vdwg.mxu0
    %759 = vmatprep.subr.mxu0 0.0
    %v760 = vand.u32 %v49, 4294901760
    %v761 = vsub.f32 %v49, %v760
    %v762 = vand.u32 %v761, 4294901760
    %v763 = vsub.f32 %v761, %v762
    %v764 = vand.u32 %v763, 4294901760
    %765 = vmatpush1.msra.mxu0 %v764
    %766 = vmatprep.subr.mxu0 0.0
    %v767 = vand.u32 %v50, 4294901760
    %v768 = vsub.f32 %v50, %v767
    %v769 = vand.u32 %v768, 4294901760
    %v770 = vsub.f32 %v768, %v769
    %v771 = vand.u32 %v770, 4294901760
    %772 = vmatpush1.msra.mxu0 %v771
    %773 = vmatprep.subr.mxu0 0.0
    %v774 = vand.u32 %v51, 4294901760
    %v775 = vsub.f32 %v51, %v774
    %v776 = vand.u32 %v775, 4294901760
    %v777 = vsub.f32 %v775, %v776
    %v778 = vand.u32 %v777, 4294901760
    %779 = vmatpush1.msra.mxu0 %v778
    %780 = vmatprep.subr.mxu0 0.0
    %v781 = vand.u32 %v52, 4294901760
    %v782 = vsub.f32 %v52, %v781
    %v783 = vand.u32 %v782, 4294901760
    %v784 = vsub.f32 %v782, %v783
    %v785 = vand.u32 %v784, 4294901760
    %786 = vmatpush1.msra.mxu0 %v785
    %787 = vmatprep.subr.mxu0 0.0
    %v788 = vand.u32 %v53, 4294901760
    %v789 = vsub.f32 %v53, %v788
    %v790 = vand.u32 %v789, 4294901760
    %v791 = vsub.f32 %v789, %v790
    %v792 = vand.u32 %v791, 4294901760
    %793 = vmatpush1.msra.mxu0 %v792
    %794 = vmatprep.subr.mxu0 0.0
    %v795 = vand.u32 %v54, 4294901760
    %v796 = vsub.f32 %v54, %v795
    %v797 = vand.u32 %v796, 4294901760
    %v798 = vsub.f32 %v796, %v797
    %v799 = vand.u32 %v798, 4294901760
    %800 = vmatpush1.msra.mxu0 %v799
    %801 = vmatprep.subr.mxu0 0.0
    %v802 = vand.u32 %v55, 4294901760
    %v803 = vsub.f32 %v55, %v802
    %v804 = vand.u32 %v803, 4294901760
    %v805 = vsub.f32 %v803, %v804
    %v806 = vand.u32 %v805, 4294901760
    %807 = vmatpush1.msra.mxu0 %v806
    %808 = vmatprep.subr.mxu0 0.0
    %v809 = vand.u32 %v56, 4294901760
    %v810 = vsub.f32 %v56, %v809
    %v811 = vand.u32 %v810, 4294901760
    %v812 = vsub.f32 %v810, %v811
    %v813 = vand.u32 %v812, 4294901760
    %814 = vmatpush1.msra.mxu0 %v813
    %815 = vmatprep.subr.mxu0 0.0
    %v816 = vand.u32 %v57, 4294901760
    %v817 = vsub.f32 %v57, %v816
    %v818 = vand.u32 %v817, 4294901760
    %v819 = vsub.f32 %v817, %v818
    %v820 = vand.u32 %v819, 4294901760
    %821 = vmatpush1.msra.mxu0 %v820
    %822 = vmatprep.subr.mxu0 0.0
    %v823 = vand.u32 %v58, 4294901760
    %v824 = vsub.f32 %v58, %v823
    %v825 = vand.u32 %v824, 4294901760
    %v826 = vsub.f32 %v824, %v825
    %v827 = vand.u32 %v826, 4294901760
    %828 = vmatpush1.msra.mxu0 %v827
    %829 = vmatprep.subr.mxu0 0.0
    %v830 = vand.u32 %v59, 4294901760
    %v831 = vsub.f32 %v59, %v830
    %v832 = vand.u32 %v831, 4294901760
    %v833 = vsub.f32 %v831, %v832
    %v834 = vand.u32 %v833, 4294901760
    %835 = vmatpush1.msra.mxu0 %v834
    %836 = vmatprep.subr.mxu0 0.0
    %v837 = vand.u32 %v60, 4294901760
    %v838 = vsub.f32 %v60, %v837
    %v839 = vand.u32 %v838, 4294901760
    %v840 = vsub.f32 %v838, %v839
    %v841 = vand.u32 %v840, 4294901760
    %842 = vmatpush1.msra.mxu0 %v841
    %843 = vmatprep.subr.mxu0 0.0
    %v844 = vand.u32 %v61, 4294901760
    %v845 = vsub.f32 %v61, %v844
    %v846 = vand.u32 %v845, 4294901760
    %v847 = vsub.f32 %v845, %v846
    %v848 = vand.u32 %v847, 4294901760
    %849 = vmatpush1.msra.mxu0 %v848
    %850 = vmatprep.subr.mxu0 0.0
    %v851 = vand.u32 %v62, 4294901760
    %v852 = vsub.f32 %v62, %v851
    %v853 = vand.u32 %v852, 4294901760
    %v854 = vsub.f32 %v852, %v853
    %v855 = vand.u32 %v854, 4294901760
    %856 = vmatpush1.msra.mxu0 %v855
    %857 = vmatprep.subr.mxu0 0.0
    %v858 = vand.u32 %v63, 4294901760
    %v859 = vsub.f32 %v63, %v858
    %v860 = vand.u32 %v859, 4294901760
    %v861 = vsub.f32 %v859, %v860
    %v862 = vand.u32 %v861, 4294901760
    %863 = vmatpush1.msra.mxu0 %v862
    %864 = vmatprep.subr.mxu0 0.0
    %v865 = vand.u32 %v64, 4294901760
    %v866 = vsub.f32 %v64, %v865
    %v867 = vand.u32 %v866, 4294901760
    %v868 = vsub.f32 %v866, %v867
    %v869 = vand.u32 %v868, 4294901760
    %870 = vmatpush1.msra.mxu0 %v869
    %871 = vmatprep.subr.mxu0 0.0
    %872 = vmatpush1.msra.mxu0 0.0
    %873 = vmatprep.subr.mxu0 0.0
    %874 = vmatpush1.msra.mxu0 0.0
    %875 = vmatprep.subr.mxu0 0.0
    %876 = vmatpush1.msra.mxu0 0.0
    %877 = vmatprep.subr.mxu0 0.0
    %878 = vmatpush1.msra.mxu0 0.0
    %879 = vmatprep.subr.mxu0 0.0
    %880 = vmatpush1.msra.mxu0 0.0
    %881 = vmatprep.subr.mxu0 0.0
    %882 = vmatpush1.msra.mxu0 0.0
    %883 = vmatprep.subr.mxu0 0.0
    %884 = vmatpush1.msra.mxu0 0.0
    %885 = vmatprep.subr.mxu0 0.0
    %886 = vmatpush1.msra.mxu0 0.0
    %887 = vmatprep.subr.mxu0 0.0
    %888 = vmatpush1.msra.mxu0 0.0
    %889 = vmatprep.subr.mxu0 0.0
    %890 = vmatpush1.msra.mxu0 0.0
    %891 = vmatprep.subr.mxu0 0.0
    %892 = vmatpush1.msra.mxu0 0.0
    %893 = vmatprep.subr.mxu0 0.0
    %894 = vmatpush1.msra.mxu0 0.0
    %895 = vmatprep.subr.mxu0 0.0
    %896 = vmatpush1.msra.mxu0 0.0
    %897 = vmatprep.subr.mxu0 0.0
    %898 = vmatpush1.msra.mxu0 0.0
    %899 = vmatprep.subr.mxu0 0.0
    %900 = vmatpush1.msra.mxu0 0.0
    %901 = vmatprep.subr.mxu0 0.0
    %902 = vmatpush1.msra.mxu0 0.0
    %903 = vmatprep.mubr.f32.mxu0 0.0
    %v904 = vand.u32 %v656, 4294901760
    %905 = vmatmul.mubr.f32.gmra.mrb[0].mxu0 %v904
    %v906 = vpop.f32.mrb[0].mxu0
    %v907 = vadd.f32 %v746, %v906
    %v908 = vpop.f32.mrb[0].mxu0
    %909 = vmatprep.mubr.f32.mxu0 0.0
    %v910 = vand.u32 %v657, 4294901760
    %911 = vmatmul.mubr.f32.gmra.mrb[0].mxu0 %v910
    %v912 = vpop.f32.mrb[0].mxu0
    %v913 = vadd.f32 %v756, %v912
    %v914 = vpop.f32.mrb[0].mxu0
    %915 = vdwg.mxu0
    %916 = vmatprep.subr.mxu0 0.0
    %v917 = vand.u32 %v49, 4294901760
    %v918 = vsub.f32 %v49, %v917
    %919 = vmatpush1.msra.mxu0 %v918
    %920 = vmatprep.subr.mxu0 0.0
    %v921 = vand.u32 %v50, 4294901760
    %v922 = vsub.f32 %v50, %v921
    %923 = vmatpush1.msra.mxu0 %v922
    %924 = vmatprep.subr.mxu0 0.0
    %v925 = vand.u32 %v51, 4294901760
    %v926 = vsub.f32 %v51, %v925
    %927 = vmatpush1.msra.mxu0 %v926
    %928 = vmatprep.subr.mxu0 0.0
    %v929 = vand.u32 %v52, 4294901760
    %v930 = vsub.f32 %v52, %v929
    %931 = vmatpush1.msra.mxu0 %v930
    %932 = vmatprep.subr.mxu0 0.0
    %v933 = vand.u32 %v53, 4294901760
    %v934 = vsub.f32 %v53, %v933
    %935 = vmatpush1.msra.mxu0 %v934
    %936 = vmatprep.subr.mxu0 0.0
    %v937 = vand.u32 %v54, 4294901760
    %v938 = vsub.f32 %v54, %v937
    %939 = vmatpush1.msra.mxu0 %v938
    %940 = vmatprep.subr.mxu0 0.0
    %v941 = vand.u32 %v55, 4294901760
    %v942 = vsub.f32 %v55, %v941
    %943 = vmatpush1.msra.mxu0 %v942
    %944 = vmatprep.subr.mxu0 0.0
    %v945 = vand.u32 %v56, 4294901760
    %v946 = vsub.f32 %v56, %v945
    %947 = vmatpush1.msra.mxu0 %v946
    %948 = vmatprep.subr.mxu0 0.0
    %v949 = vand.u32 %v57, 4294901760
    %v950 = vsub.f32 %v57, %v949
    %951 = vmatpush1.msra.mxu0 %v950
    %952 = vmatprep.subr.mxu0 0.0
    %v953 = vand.u32 %v58, 4294901760
    %v954 = vsub.f32 %v58, %v953
    %955 = vmatpush1.msra.mxu0 %v954
    %956 = vmatprep.subr.mxu0 0.0
    %v957 = vand.u32 %v59, 4294901760
    %v958 = vsub.f32 %v59, %v957
    %959 = vmatpush1.msra.mxu0 %v958
    %960 = vmatprep.subr.mxu0 0.0
    %v961 = vand.u32 %v60, 4294901760
    %v962 = vsub.f32 %v60, %v961
    %963 = vmatpush1.msra.mxu0 %v962
    %964 = vmatprep.subr.mxu0 0.0
    %v965 = vand.u32 %v61, 4294901760
    %v966 = vsub.f32 %v61, %v965
    %967 = vmatpush1.msra.mxu0 %v966
    %968 = vmatprep.subr.mxu0 0.0
    %v969 = vand.u32 %v62, 4294901760
    %v970 = vsub.f32 %v62, %v969
    %971 = vmatpush1.msra.mxu0 %v970
    %972 = vmatprep.subr.mxu0 0.0
    %v973 = vand.u32 %v63, 4294901760
    %v974 = vsub.f32 %v63, %v973
    %975 = vmatpush1.msra.mxu0 %v974
    %976 = vmatprep.subr.mxu0 0.0
    %v977 = vand.u32 %v64, 4294901760
    %v978 = vsub.f32 %v64, %v977
    %979 = vmatpush1.msra.mxu0 %v978
    %980 = vmatprep.subr.mxu0 0.0
    %981 = vmatpush1.msra.mxu0 0.0
    %982 = vmatprep.subr.mxu0 0.0
    %983 = vmatpush1.msra.mxu0 0.0
    %984 = vmatprep.subr.mxu0 0.0
    %985 = vmatpush1.msra.mxu0 0.0
    %986 = vmatprep.subr.mxu0 0.0
    %987 = vmatpush1.msra.mxu0 0.0
    %988 = vmatprep.subr.mxu0 0.0
    %989 = vmatpush1.msra.mxu0 0.0
    %990 = vmatprep.subr.mxu0 0.0
    %991 = vmatpush1.msra.mxu0 0.0
    %992 = vmatprep.subr.mxu0 0.0
    %993 = vmatpush1.msra.mxu0 0.0
    %994 = vmatprep.subr.mxu0 0.0
    %995 = vmatpush1.msra.mxu0 0.0
    %996 = vmatprep.subr.mxu0 0.0
    %997 = vmatpush1.msra.mxu0 0.0
    %998 = vmatprep.subr.mxu0 0.0
    %999 = vmatpush1.msra.mxu0 0.0
    %1000 = vmatprep.subr.mxu0 0.0
    %1001 = vmatpush1.msra.mxu0 0.0
    %1002 = vmatprep.subr.mxu0 0.0
    %1003 = vmatpush1.msra.mxu0 0.0
    %1004 = vmatprep.subr.mxu0 0.0
    %1005 = vmatpush1.msra.mxu0 0.0
    %1006 = vmatprep.subr.mxu0 0.0
    %1007 = vmatpush1.msra.mxu0 0.0
    %1008 = vmatprep.subr.mxu0 0.0
    %1009 = vmatpush1.msra.mxu0 0.0
    %1010 = vmatprep.subr.mxu0 0.0
    %1011 = vmatpush1.msra.mxu0 0.0
    %1012 = vmatprep.mubr.f32.mxu0 0.0
    %v1013 = vand.u32 %v656, 4294901760
    %v1014 = vsub.f32 %v656, %v1013
    %1015 = vmatmul.mubr.f32.gmra.mrb[0].mxu0 %v1014
    %v1016 = vpop.f32.mrb[0].mxu0
    %v1017 = vadd.f32 %v907, %v1016
    %v1018 = vpop.f32.mrb[0].mxu0
    %1019 = vmatprep.mubr.f32.mxu0 0.0
    %v1020 = vand.u32 %v657, 4294901760
    %v1021 = vsub.f32 %v657, %v1020
    %1022 = vmatmul.mubr.f32.gmra.mrb[0].mxu0 %v1021
    %v1023 = vpop.f32.mrb[0].mxu0
    %v1024 = vadd.f32 %v913, %v1023
    %v1025 = vpop.f32.mrb[0].mxu0
    %1026 = vdwg.mxu0
    %1027 = vmatprep.subr.mxu0 0.0
    %v1028 = vand.u32 %v49, 4294901760
    %1029 = vmatpush1.msra.mxu0 %v1028
    %1030 = vmatprep.subr.mxu0 0.0
    %v1031 = vand.u32 %v50, 4294901760
    %1032 = vmatpush1.msra.mxu0 %v1031
    %1033 = vmatprep.subr.mxu0 0.0
    %v1034 = vand.u32 %v51, 4294901760
    %1035 = vmatpush1.msra.mxu0 %v1034
    %1036 = vmatprep.subr.mxu0 0.0
    %v1037 = vand.u32 %v52, 4294901760
    %1038 = vmatpush1.msra.mxu0 %v1037
    %1039 = vmatprep.subr.mxu0 0.0
    %v1040 = vand.u32 %v53, 4294901760
    %1041 = vmatpush1.msra.mxu0 %v1040
    %1042 = vmatprep.subr.mxu0 0.0
    %v1043 = vand.u32 %v54, 4294901760
    %1044 = vmatpush1.msra.mxu0 %v1043
    %1045 = vmatprep.subr.mxu0 0.0
    %v1046 = vand.u32 %v55, 4294901760
    %1047 = vmatpush1.msra.mxu0 %v1046
    %1048 = vmatprep.subr.mxu0 0.0
    %v1049 = vand.u32 %v56, 4294901760
    %1050 = vmatpush1.msra.mxu0 %v1049
    %1051 = vmatprep.subr.mxu0 0.0
    %v1052 = vand.u32 %v57, 4294901760
    %1053 = vmatpush1.msra.mxu0 %v1052
    %1054 = vmatprep.subr.mxu0 0.0
    %v1055 = vand.u32 %v58, 4294901760
    %1056 = vmatpush1.msra.mxu0 %v1055
    %1057 = vmatprep.subr.mxu0 0.0
    %v1058 = vand.u32 %v59, 4294901760
    %1059 = vmatpush1.msra.mxu0 %v1058
    %1060 = vmatprep.subr.mxu0 0.0
    %v1061 = vand.u32 %v60, 4294901760
    %1062 = vmatpush1.msra.mxu0 %v1061
    %1063 = vmatprep.subr.mxu0 0.0
    %v1064 = vand.u32 %v61, 4294901760
    %1065 = vmatpush1.msra.mxu0 %v1064
    %1066 = vmatprep.subr.mxu0 0.0
    %v1067 = vand.u32 %v62, 4294901760
    %1068 = vmatpush1.msra.mxu0 %v1067
    %1069 = vmatprep.subr.mxu0 0.0
    %v1070 = vand.u32 %v63, 4294901760
    %1071 = vmatpush1.msra.mxu0 %v1070
    %1072 = vmatprep.subr.mxu0 0.0
    %v1073 = vand.u32 %v64, 4294901760
    %1074 = vmatpush1.msra.mxu0 %v1073
    %1075 = vmatprep.subr.mxu0 0.0
    %1076 = vmatpush1.msra.mxu0 0.0
    %1077 = vmatprep.subr.mxu0 0.0
    %1078 = vmatpush1.msra.mxu0 0.0
    %1079 = vmatprep.subr.mxu0 0.0
    %1080 = vmatpush1.msra.mxu0 0.0
    %1081 = vmatprep.subr.mxu0 0.0
    %1082 = vmatpush1.msra.mxu0 0.0
    %1083 = vmatprep.subr.mxu0 0.0
    %1084 = vmatpush1.msra.mxu0 0.0
    %1085 = vmatprep.subr.mxu0 0.0
    %1086 = vmatpush1.msra.mxu0 0.0
    %1087 = vmatprep.subr.mxu0 0.0
    %1088 = vmatpush1.msra.mxu0 0.0
    %1089 = vmatprep.subr.mxu0 0.0
    %1090 = vmatpush1.msra.mxu0 0.0
    %1091 = vmatprep.subr.mxu0 0.0
    %1092 = vmatpush1.msra.mxu0 0.0
    %1093 = vmatprep.subr.mxu0 0.0
    %1094 = vmatpush1.msra.mxu0 0.0
    %1095 = vmatprep.subr.mxu0 0.0
    %1096 = vmatpush1.msra.mxu0 0.0
    %1097 = vmatprep.subr.mxu0 0.0
    %1098 = vmatpush1.msra.mxu0 0.0
    %1099 = vmatprep.subr.mxu0 0.0
    %1100 = vmatpush1.msra.mxu0 0.0
    %1101 = vmatprep.subr.mxu0 0.0
    %1102 = vmatpush1.msra.mxu0 0.0
    %1103 = vmatprep.subr.mxu0 0.0
    %1104 = vmatpush1.msra.mxu0 0.0
    %1105 = vmatprep.subr.mxu0 0.0
    %1106 = vmatpush1.msra.mxu0 0.0
    %1107 = vmatprep.mubr.f32.mxu0 0.0
    %v1108 = vand.u32 %v656, 4294901760
    %v1109 = vsub.f32 %v656, %v1108
    %v1110 = vand.u32 %v1109, 4294901760
    %1111 = vmatmul.mubr.f32.gmra.mrb[0].mxu0 %v1110
    %v1112 = vpop.f32.mrb[0].mxu0
    %v1113 = vadd.f32 %v1017, %v1112
    %v1114 = vpop.f32.mrb[0].mxu0
    %1115 = vmatprep.mubr.f32.mxu0 0.0
    %v1116 = vand.u32 %v657, 4294901760
    %v1117 = vsub.f32 %v657, %v1116
    %v1118 = vand.u32 %v1117, 4294901760
    %1119 = vmatmul.mubr.f32.gmra.mrb[0].mxu0 %v1118
    %v1120 = vpop.f32.mrb[0].mxu0
    %v1121 = vadd.f32 %v1024, %v1120
    %v1122 = vpop.f32.mrb[0].mxu0
    %1123 = vdwg.mxu0
    %1124 = vmatprep.subr.mxu0 0.0
    %v1125 = vand.u32 %v49, 4294901760
    %v1126 = vsub.f32 %v49, %v1125
    %v1127 = vand.u32 %v1126, 4294901760
    %1128 = vmatpush1.msra.mxu0 %v1127
    %1129 = vmatprep.subr.mxu0 0.0
    %v1130 = vand.u32 %v50, 4294901760
    %v1131 = vsub.f32 %v50, %v1130
    %v1132 = vand.u32 %v1131, 4294901760
    %1133 = vmatpush1.msra.mxu0 %v1132
    %1134 = vmatprep.subr.mxu0 0.0
    %v1135 = vand.u32 %v51, 4294901760
    %v1136 = vsub.f32 %v51, %v1135
    %v1137 = vand.u32 %v1136, 4294901760
    %1138 = vmatpush1.msra.mxu0 %v1137
    %1139 = vmatprep.subr.mxu0 0.0
    %v1140 = vand.u32 %v52, 4294901760
    %v1141 = vsub.f32 %v52, %v1140
    %v1142 = vand.u32 %v1141, 4294901760
    %1143 = vmatpush1.msra.mxu0 %v1142
    %1144 = vmatprep.subr.mxu0 0.0
    %v1145 = vand.u32 %v53, 4294901760
    %v1146 = vsub.f32 %v53, %v1145
    %v1147 = vand.u32 %v1146, 4294901760
    %1148 = vmatpush1.msra.mxu0 %v1147
    %1149 = vmatprep.subr.mxu0 0.0
    %v1150 = vand.u32 %v54, 4294901760
    %v1151 = vsub.f32 %v54, %v1150
    %v1152 = vand.u32 %v1151, 4294901760
    %1153 = vmatpush1.msra.mxu0 %v1152
    %1154 = vmatprep.subr.mxu0 0.0
    %v1155 = vand.u32 %v55, 4294901760
    %v1156 = vsub.f32 %v55, %v1155
    %v1157 = vand.u32 %v1156, 4294901760
    %1158 = vmatpush1.msra.mxu0 %v1157
    %1159 = vmatprep.subr.mxu0 0.0
    %v1160 = vand.u32 %v56, 4294901760
    %v1161 = vsub.f32 %v56, %v1160
    %v1162 = vand.u32 %v1161, 4294901760
    %1163 = vmatpush1.msra.mxu0 %v1162
    %1164 = vmatprep.subr.mxu0 0.0
    %v1165 = vand.u32 %v57, 4294901760
    %v1166 = vsub.f32 %v57, %v1165
    %v1167 = vand.u32 %v1166, 4294901760
    %1168 = vmatpush1.msra.mxu0 %v1167
    %1169 = vmatprep.subr.mxu0 0.0
    %v1170 = vand.u32 %v58, 4294901760
    %v1171 = vsub.f32 %v58, %v1170
    %v1172 = vand.u32 %v1171, 4294901760
    %1173 = vmatpush1.msra.mxu0 %v1172
    %1174 = vmatprep.subr.mxu0 0.0
    %v1175 = vand.u32 %v59, 4294901760
    %v1176 = vsub.f32 %v59, %v1175
    %v1177 = vand.u32 %v1176, 4294901760
    %1178 = vmatpush1.msra.mxu0 %v1177
    %1179 = vmatprep.subr.mxu0 0.0
    %v1180 = vand.u32 %v60, 4294901760
    %v1181 = vsub.f32 %v60, %v1180
    %v1182 = vand.u32 %v1181, 4294901760
    %1183 = vmatpush1.msra.mxu0 %v1182
    %1184 = vmatprep.subr.mxu0 0.0
    %v1185 = vand.u32 %v61, 4294901760
    %v1186 = vsub.f32 %v61, %v1185
    %v1187 = vand.u32 %v1186, 4294901760
    %1188 = vmatpush1.msra.mxu0 %v1187
    %1189 = vmatprep.subr.mxu0 0.0
    %v1190 = vand.u32 %v62, 4294901760
    %v1191 = vsub.f32 %v62, %v1190
    %v1192 = vand.u32 %v1191, 4294901760
    %1193 = vmatpush1.msra.mxu0 %v1192
    %1194 = vmatprep.subr.mxu0 0.0
    %v1195 = vand.u32 %v63, 4294901760
    %v1196 = vsub.f32 %v63, %v1195
    %v1197 = vand.u32 %v1196, 4294901760
    %1198 = vmatpush1.msra.mxu0 %v1197
    %1199 = vmatprep.subr.mxu0 0.0
    %v1200 = vand.u32 %v64, 4294901760
    %v1201 = vsub.f32 %v64, %v1200
    %v1202 = vand.u32 %v1201, 4294901760
    %1203 = vmatpush1.msra.mxu0 %v1202
    %1204 = vmatprep.subr.mxu0 0.0
    %1205 = vmatpush1.msra.mxu0 0.0
    %1206 = vmatprep.subr.mxu0 0.0
    %1207 = vmatpush1.msra.mxu0 0.0
    %1208 = vmatprep.subr.mxu0 0.0
    %1209 = vmatpush1.msra.mxu0 0.0
    %1210 = vmatprep.subr.mxu0 0.0
    %1211 = vmatpush1.msra.mxu0 0.0
    %1212 = vmatprep.subr.mxu0 0.0
    %1213 = vmatpush1.msra.mxu0 0.0
    %1214 = vmatprep.subr.mxu0 0.0
    %1215 = vmatpush1.msra.mxu0 0.0
    %1216 = vmatprep.subr.mxu0 0.0
    %1217 = vmatpush1.msra.mxu0 0.0
    %1218 = vmatprep.subr.mxu0 0.0
    %1219 = vmatpush1.msra.mxu0 0.0
    %1220 = vmatprep.subr.mxu0 0.0
    %1221 = vmatpush1.msra.mxu0 0.0
    %1222 = vmatprep.subr.mxu0 0.0
    %1223 = vmatpush1.msra.mxu0 0.0
    %1224 = vmatprep.subr.mxu0 0.0
    %1225 = vmatpush1.msra.mxu0 0.0
    %1226 = vmatprep.subr.mxu0 0.0
    %1227 = vmatpush1.msra.mxu0 0.0
    %1228 = vmatprep.subr.mxu0 0.0
    %1229 = vmatpush1.msra.mxu0 0.0
    %1230 = vmatprep.subr.mxu0 0.0
    %1231 = vmatpush1.msra.mxu0 0.0
    %1232 = vmatprep.subr.mxu0 0.0
    %1233 = vmatpush1.msra.mxu0 0.0
    %1234 = vmatprep.subr.mxu0 0.0
    %1235 = vmatpush1.msra.mxu0 0.0
    %1236 = vmatprep.mubr.f32.mxu0 0.0
    %v1237 = vand.u32 %v656, 4294901760
    %1238 = vmatmul.mubr.f32.gmra.mrb[0].mxu0 %v1237
    %v1239 = vpop.f32.mrb[0].mxu0
    %v1240 = vadd.f32 %v1113, %v1239
    %v1241 = vpop.f32.mrb[0].mxu0
    %1242 = vmatprep.mubr.f32.mxu0 0.0
    %v1243 = vand.u32 %v657, 4294901760
    %1244 = vmatmul.mubr.f32.gmra.mrb[0].mxu0 %v1243
    %v1245 = vpop.f32.mrb[0].mxu0
    %v1246 = vadd.f32 %v1121, %v1245
    %v1247 = vpop.f32.mrb[0].mxu0
    %1248 = vdwg.mxu0
    %1249 = vmatprep.subr.mxu0 0.0
    %v1250 = vand.u32 %v49, 4294901760
    %1251 = vmatpush1.msra.mxu0 %v1250
    %1252 = vmatprep.subr.mxu0 0.0
    %v1253 = vand.u32 %v50, 4294901760
    %1254 = vmatpush1.msra.mxu0 %v1253
    %1255 = vmatprep.subr.mxu0 0.0
    %v1256 = vand.u32 %v51, 4294901760
    %1257 = vmatpush1.msra.mxu0 %v1256
    %1258 = vmatprep.subr.mxu0 0.0
    %v1259 = vand.u32 %v52, 4294901760
    %1260 = vmatpush1.msra.mxu0 %v1259
    %1261 = vmatprep.subr.mxu0 0.0
    %v1262 = vand.u32 %v53, 4294901760
    %1263 = vmatpush1.msra.mxu0 %v1262
    %1264 = vmatprep.subr.mxu0 0.0
    %v1265 = vand.u32 %v54, 4294901760
    %1266 = vmatpush1.msra.mxu0 %v1265
    %1267 = vmatprep.subr.mxu0 0.0
    %v1268 = vand.u32 %v55, 4294901760
    %1269 = vmatpush1.msra.mxu0 %v1268
    %1270 = vmatprep.subr.mxu0 0.0
    %v1271 = vand.u32 %v56, 4294901760
    %1272 = vmatpush1.msra.mxu0 %v1271
    %1273 = vmatprep.subr.mxu0 0.0
    %v1274 = vand.u32 %v57, 4294901760
    %1275 = vmatpush1.msra.mxu0 %v1274
    %1276 = vmatprep.subr.mxu0 0.0
    %v1277 = vand.u32 %v58, 4294901760
    %1278 = vmatpush1.msra.mxu0 %v1277
    %1279 = vmatprep.subr.mxu0 0.0
    %v1280 = vand.u32 %v59, 4294901760
    %1281 = vmatpush1.msra.mxu0 %v1280
    %1282 = vmatprep.subr.mxu0 0.0
    %v1283 = vand.u32 %v60, 4294901760
    %1284 = vmatpush1.msra.mxu0 %v1283
    %1285 = vmatprep.subr.mxu0 0.0
    %v1286 = vand.u32 %v61, 4294901760
    %1287 = vmatpush1.msra.mxu0 %v1286
    %1288 = vmatprep.subr.mxu0 0.0
    %v1289 = vand.u32 %v62, 4294901760
    %1290 = vmatpush1.msra.mxu0 %v1289
    %1291 = vmatprep.subr.mxu0 0.0
    %v1292 = vand.u32 %v63, 4294901760
    %1293 = vmatpush1.msra.mxu0 %v1292
    %1294 = vmatprep.subr.mxu0 0.0
    %v1295 = vand.u32 %v64, 4294901760
    %1296 = vmatpush1.msra.mxu0 %v1295
    %1297 = vmatprep.subr.mxu0 0.0
    %1298 = vmatpush1.msra.mxu0 0.0
    %1299 = vmatprep.subr.mxu0 0.0
    %1300 = vmatpush1.msra.mxu0 0.0
    %1301 = vmatprep.subr.mxu0 0.0
    %1302 = vmatpush1.msra.mxu0 0.0
    %1303 = vmatprep.subr.mxu0 0.0
    %1304 = vmatpush1.msra.mxu0 0.0
    %1305 = vmatprep.subr.mxu0 0.0
    %1306 = vmatpush1.msra.mxu0 0.0
    %1307 = vmatprep.subr.mxu0 0.0
    %1308 = vmatpush1.msra.mxu0 0.0
    %1309 = vmatprep.subr.mxu0 0.0
    %1310 = vmatpush1.msra.mxu0 0.0
    %1311 = vmatprep.subr.mxu0 0.0
    %1312 = vmatpush1.msra.mxu0 0.0
    %1313 = vmatprep.subr.mxu0 0.0
    %1314 = vmatpush1.msra.mxu0 0.0
    %1315 = vmatprep.subr.mxu0 0.0
    %1316 = vmatpush1.msra.mxu0 0.0
    %1317 = vmatprep.subr.mxu0 0.0
    %1318 = vmatpush1.msra.mxu0 0.0
    %1319 = vmatprep.subr.mxu0 0.0
    %1320 = vmatpush1.msra.mxu0 0.0
    %1321 = vmatprep.subr.mxu0 0.0
    %1322 = vmatpush1.msra.mxu0 0.0
    %1323 = vmatprep.subr.mxu0 0.0
    %1324 = vmatpush1.msra.mxu0 0.0
    %1325 = vmatprep.subr.mxu0 0.0
    %1326 = vmatpush1.msra.mxu0 0.0
    %1327 = vmatprep.subr.mxu0 0.0
    %1328 = vmatpush1.msra.mxu0 0.0
    %1329 = vmatprep.mubr.f32.mxu0 0.0
    %v1330 = vand.u32 %v656, 4294901760
    %1331 = vmatmul.mubr.f32.gmra.mrb[0].mxu0 %v1330
    %v1332 = vpop.f32.mrb[0].mxu0
    %v1333 = vadd.f32 %v1240, %v1332
    %v1334 = vpop.f32.mrb[0].mxu0
    %1335 = vmatprep.mubr.f32.mxu0 0.0
    %v1336 = vand.u32 %v657, 4294901760
    %1337 = vmatmul.mubr.f32.gmra.mrb[0].mxu0 %v1336
    %v1338 = vpop.f32.mrb[0].mxu0
    %v1339 = vadd.f32 %v1246, %v1338
    %v1340 = vpop.f32.mrb[0].mxu0
    %1341 = vdwg.mxu0
    %1342 = vst [vmem:[%s2] sm:$0xff] %v1333
    %1343 = vst [vmem:[%s2 + $0x8] sm:$0xff] %v1339
    // Predicated region
    $region18: #{rnn_forward.1} parent=1 // pred_check
      _
    $region19: #{rnn_forward.1} parent=1 // pred_check_branch
      %1345 = sbr.rel (0) target = $region21
    $region20: #{rnn_forward.1} parent=1 // pred_region
      _
    $region21: #{rnn_forward.1} parent=1 // pred_fallthru
      _
    // Predicated region
    $region22: #{rnn_forward.1} parent=1 // pred_check
      _
    $region23: #{rnn_forward.1} parent=1 // pred_check_branch
      %1347 = sbr.rel (0) target = $region25
    $region24: #{rnn_forward.1} parent=1 // pred_region
      _
    $region25: #{rnn_forward.1} parent=1 // pred_fallthru
      _
    %1348 = vsyncpa [#allocation3], 1
    %1349 = vsyncpa [#allocation5], 1

</llo_original>
